<compile_context>
chip_gen: v6e
topology: v6e:2x2x1
jax: 0.10.0
libtpu: 0.0.40
codegen_flags: <defaults>
</compile_context>

<pallas_src>
import functools

import jax
import jax.numpy as jnp
from jax.experimental import pallas as pl
from jax.experimental.pallas import tpu as pltpu


_VMEM_LIMIT = 56 * 1024 * 1024  # above the 16/32 MiB scoped defaults, <= v7x physical


# ---------------------------------------------------------------------------
# Tile selection helpers
# ---------------------------------------------------------------------------
def _pick_row_tile(n, target=256, align=8):
    """Largest multiple-of-`align` divisor of n <= target (prefer >=2 grid steps)."""
    divisors = [d for d in range(align, min(n, target) + 1, align) if n % d == 0]
    if not divisors:
        return n
    best = divisors[-1]
    if n // best < 2 and len(divisors) > 1:
        best = divisors[-2]
    return best


def _pick_lane_tile(n, target=512):
    """Largest multiple-of-128 divisor of n <= target, else full width (lane-dense)."""
    best = None
    for d in range(128, min(n, target) + 1, 128):
        if n % d == 0:
            best = d
    return best if best is not None else n


def _pick_batch_block(B, S, max_rows=2048):
    """Pack several windows/batches per grid step when each one is tiny (S small)."""
    best = 1
    for bb in range(1, B + 1):
        if B % bb == 0 and bb * S <= max_rows:
            best = bb
    return best


def _pick_head_group(nh, hd, S, tq, bb, qkv_isz, k_extra, budget=40 << 20):
    """Largest legal head group whose per-step VMEM footprint fits the budget.

    Legality (last-two-dims (8,128) rule): gh == nh, or gh % 8 == 0 with gh*hd a
    multiple of 128 (lane-dense output columns).
    """
    legal = [g for g in range(1, nh + 1)
             if nh % g == 0 and (g == nh or (g % 8 == 0 and (g * hd) % 128 == 0))]

    def est(g):
        ghd = g * hd
        inp = 2 * (bb * tq * ghd + 2 * bb * S * ghd) * qkv_isz   # q,k,v double-buffered
        relb = 2 * bb * g * tq * k_extra * 4                     # rel_h/rel_w blocks
        outb = 2 * bb * tq * ghd * 4                             # output double buffer
        inter = 4 * bb * tq * S * 4 + bb * tq * ghd * 4          # s/p temps + o list
        return inp + relb + outb + inter

    for g in sorted(legal, reverse=True):
        if est(g) <= budget:
            return g
    # TODO(synk): add flash-style KV-axis tiling (online softmax) for configs where
    # even the smallest legal head group exceeds the VMEM budget (e.g. S=4096, nh=12).
    return min(legal)


# ---------------------------------------------------------------------------
# Linear (x @ W + b) kernel — tiled, parallel grid, bf16-capable MXU operands
# ---------------------------------------------------------------------------
def linear_kernel(x_ref, w_ref, b_ref, o_ref, *, compute_dtype):
    x = x_ref[...].astype(compute_dtype)
    w = w_ref[...].astype(compute_dtype)
    acc = jnp.dot(x, w, preferred_element_type=jnp.float32)
    o_ref[...] = (acc + b_ref[...].astype(jnp.float32)).astype(o_ref.dtype)


def linear_pallas(x2d, w, b, *, out_dtype=None, compute_dtype=jnp.float32,
                  tm_target=256, tn_target=512):
    n, din = x2d.shape
    dout = w.shape[1]
    out_dtype = x2d.dtype if out_dtype is None else out_dtype
    tm = _pick_row_tile(n, tm_target)
    tn = _pick_lane_tile(dout, tn_target)
    grid = (n // tm, dout // tn)
    isz = jnp.dtype(compute_dtype).itemsize
    cost = pl.CostEstimate(
        flops=int(2 * n * din * dout),
        transcendentals=0,
        bytes_accessed=int(isz * (n * din * grid[1] + din * dout * grid[0])
                           + 4 * (n * dout + dout)),
    )
    return pl.pallas_call(
        functools.partial(linear_kernel, compute_dtype=compute_dtype),
        out_shape=jax.ShapeDtypeStruct((n, dout), out_dtype),
        grid=grid,
        in_specs=[
            pl.BlockSpec((tm, din), lambda i, j: (i, 0)),
            pl.BlockSpec((din, tn), lambda i, j: (0, j)),
            pl.BlockSpec((1, tn), lambda i, j: (0, j)),
        ],
        out_specs=pl.BlockSpec((tm, tn), lambda i, j: (i, j)),
        compiler_params=pltpu.CompilerParams(
            dimension_semantics=("parallel", "parallel"),
            vmem_limit_bytes=_VMEM_LIMIT,
        ),
        cost_estimate=cost,
    )(x2d, w, b.reshape(1, dout))


# ---------------------------------------------------------------------------
# Attention kernel: one (batch-block, head-group, q-tile) per grid step.
# Fused decomposed rel-pos bias, f32 softmax, bf16 MXU operands, single
# lane-dense full-width store.
# ---------------------------------------------------------------------------
def _attn_kernel(q_ref, k_ref, v_ref, *rest, scale, k_size, use_rel_pos,
                 compute_dtype):
    if use_rel_pos:
        rh_ref, rw_ref, o_ref = rest
    else:
        (o_ref,) = rest

    bb, tq, _, gh, hd = q_ref.shape
    S = k_ref.shape[1]

    q = q_ref[...].reshape(bb, tq, gh, hd)
    k = k_ref[...].reshape(bb, S, gh, hd)
    v = v_ref[...].reshape(bb, S, gh, hd)

    qs = (q.astype(jnp.float32) * scale).astype(compute_dtype)
    kc = k.astype(compute_dtype)
    vc = v.astype(compute_dtype)

    if use_rel_pos:
        k_h, k_w = k_size
        rh = rh_ref[...].astype(jnp.float32)   # (bb, gh, tq, k_h)
        rw = rw_ref[...].astype(jnp.float32)   # (bb, gh, tq, k_w)

    o_heads = []
    for h in range(gh):
        # Scaled QK^T (documented 3-D einsum pattern, bb as MXU batch dim).
        s = jnp.einsum("bqd,bkd->bqk", qs[:, :, h, :], kc[:, :, h, :],
                       preferred_element_type=jnp.float32)          # (bb, tq, S)
        if use_rel_pos:
            # Decomposed bias added in-place on the scores: no separate S^2 bias
            # temporary (only rh/rw plus broadcasting on the s reshape).
            s = (s.reshape(bb, tq, k_h, k_w)
                 + rh[:, h][:, :, :, None]
                 + rw[:, h][:, :, None, :]).reshape(bb, tq, k_h * k_w)

        # Numerically-stable softmax over keys; normalize once after PV.
        m = jnp.max(s, axis=-1, keepdims=True)
        p = jnp.exp(s - m)
        denom = jnp.sum(p, axis=-1, keepdims=True)
        r = pl.reciprocal(denom, approx=True)      # EUP slot (already paying for exp)
        r = r * (2.0 - denom * r)                  # one Newton step -> ~f32 exact

        o_h = jnp.einsum("bqk,bkd->bqd", p.astype(compute_dtype), vc[:, :, h, :],
                         preferred_element_type=jnp.float32)         # (bb, tq, hd)
        o_heads.append(o_h * r)

    # Single full-width lane-dense store of all heads of this group.
    o = o_heads[0] if gh == 1 else jnp.concatenate(o_heads, axis=-1)  # (bb, tq, gh*hd)
    o_ref[...] = o.astype(o_ref.dtype)


def attn_pallas(qkv5, rel_h, rel_w, scale, k_size, *, out_dtype, compute_dtype):
    # qkv5: (B, S, 3, nh, hd) -- a free reshape view of the packed qkv projection.
    B, S, three, nh, hd = qkv5.shape
    assert three == 3
    dim = nh * hd
    use_rel_pos = rel_h is not None
    k_h, k_w = k_size

    tq = _pick_row_tile(S, target=256)   # keep q tile large: MXU depth is only hd
    n_qt = S // tq
    bb = _pick_batch_block(B, S) if n_qt == 1 else 1
    k_extra = (k_h + k_w) if use_rel_pos else 0
    gh = _pick_head_group(nh, hd, S, tq, bb,
                          jnp.dtype(qkv5.dtype).itemsize, k_extra)
    n_hg = nh // gh
    ghd = gh * hd
    # q-tile axis innermost: K/V (and rel) blocks are constant over it -> no re-DMA.
    grid = (B // bb, n_hg, n_qt)

    in_specs = [
        pl.BlockSpec((bb, tq, 1, gh, hd), lambda b, g, i: (b, i, 0, g, 0)),  # q cols
        pl.BlockSpec((bb, S, 1, gh, hd), lambda b, g, i: (b, 0, 1, g, 0)),   # k cols
        pl.BlockSpec((bb, S, 1, gh, hd), lambda b, g, i: (b, 0, 2, g, 0)),   # v cols
    ]
    args = [qkv5, qkv5, qkv5]
    if use_rel_pos:
        in_specs += [
            pl.BlockSpec((bb, gh, tq, k_h), lambda b, g, i: (b, g, i, 0)),
            pl.BlockSpec((bb, gh, tq, k_w), lambda b, g, i: (b, g, i, 0)),
        ]
        args += [rel_h, rel_w]

    isz = jnp.dtype(qkv5.dtype).itemsize
    rel_bytes = 4 * (rel_h.size + rel_w.size) if use_rel_pos else 0
    cost = pl.CostEstimate(
        flops=int(4 * B * nh * S * S * hd),
        transcendentals=int(B * nh * S * S),
        bytes_accessed=int(isz * 3 * B * S * dim + rel_bytes
                           + jnp.dtype(out_dtype).itemsize * B * S * dim),
    )

    kern = functools.partial(_attn_kernel, scale=scale, k_size=k_size,
                             use_rel_pos=use_rel_pos, compute_dtype=compute_dtype)

    return pl.pallas_call(
        kern,
        out_shape=jax.ShapeDtypeStruct((B, S, dim), out_dtype),
        grid=grid,
        in_specs=in_specs,
        out_specs=pl.BlockSpec((bb, tq, ghd), lambda b, g, i: (b, i, g)),
        compiler_params=pltpu.CompilerParams(
            dimension_semantics=("parallel", "parallel", "parallel"),
            vmem_limit_bytes=_VMEM_LIMIT,
        ),
        cost_estimate=cost,
    )(*args)


# ---------------------------------------------------------------------------
# Rel-pos helpers (glue, pure JAX — tiny tensors)
# ---------------------------------------------------------------------------
def get_rel_pos_jax(q_size, k_size, rel_pos):
    max_rel_dist = int(2 * max(q_size, k_size) - 1)
    # TODO(synk): the F.interpolate (linear resize) branch is not implemented; only
    # the exact-size rel_pos table path is supported (asserts otherwise).
    assert rel_pos.shape[0] == max_rel_dist
    q_coords = jnp.arange(q_size)[:, None] * max(k_size / q_size, 1.0)
    k_coords = jnp.arange(k_size)[None, :] * max(q_size / k_size, 1.0)
    rel_coords = q_coords - k_coords + (k_size - 1) * max(q_size / k_size, 1.0)
    return rel_pos[rel_coords.astype(jnp.int32)]


def decomposed_rel_pos_terms(q_bsnh, rel_pos_h, rel_pos_w, q_size, k_size):
    """q_bsnh: (B, S, nh, hd) -> rel_h: (B, nh, S, k_h), rel_w: (B, nh, S, k_w)."""
    q_h, q_w = q_size
    k_h, k_w = k_size
    Rh = get_rel_pos_jax(q_h, k_h, rel_pos_h)   # (q_h, k_h, hd)
    Rw = get_rel_pos_jax(q_w, k_w, rel_pos_w)   # (q_w, k_w, hd)
    B, S, nh, hd = q_bsnh.shape
    r_q = q_bsnh.reshape(B, q_h, q_w, nh, hd).astype(jnp.float32)
    rel_h = jnp.einsum("bhwnc,hkc->bnhwk", r_q, Rh).reshape(B, nh, S, k_h)
    rel_w = jnp.einsum("bhwnc,wkc->bnhwk", r_q, Rw).reshape(B, nh, S, k_w)
    return rel_h, rel_w


# ---------------------------------------------------------------------------
# Attention forward (Pallas-backed)
# ---------------------------------------------------------------------------
def attention_forward(x, params, num_heads, use_rel_pos=True,
                      compute_dtype=jnp.float32):
    B, H, W, dim = x.shape
    hd = dim // num_heads
    scale = hd ** (-0.5)
    S = H * W

    # qkv projection (tiled Pallas matmul); bf16 activations when requested.
    qkv = linear_pallas(x.reshape(B * S, dim), params["w_qkv"], params["b_qkv"],
                        out_dtype=compute_dtype, compute_dtype=compute_dtype)
    # Free view (no HBM transpose): the 3*dim columns factor as (3, nh, hd).
    qkv5 = qkv.reshape(B, S, 3, num_heads, hd)

    if use_rel_pos:
        rel_h, rel_w = decomposed_rel_pos_terms(
            qkv5[:, :, 0], params["rel_pos_h"], params["rel_pos_w"], (H, W), (H, W))
    else:
        rel_h = rel_w = None  # static no-bias kernel variant; no S^2 zeros traffic

    # attention hot path -> lane-dense (B, S, dim) in compute dtype
    out = attn_pallas(qkv5, rel_h, rel_w, scale, (H, W),
                      out_dtype=compute_dtype, compute_dtype=compute_dtype)

    # output projection; final dtype matches the module input dtype.
    out = linear_pallas(out.reshape(B * S, dim), params["w_proj"], params["b_proj"],
                        out_dtype=x.dtype, compute_dtype=compute_dtype)
    return out.reshape(B, H, W, dim)


# ---------------------------------------------------------------------------
# Pure-JAX reference (mirrors the PyTorch forward exactly)
# ---------------------------------------------------------------------------
def attention_reference(x, params, num_heads, use_rel_pos=True):
    B, H, W, dim = x.shape
    hd = dim // num_heads
    scale = hd ** (-0.5)
    S = H * W
    qkv = x.reshape(B, S, dim) @ params["w_qkv"] + params["b_qkv"]
    qkv = (qkv.reshape(B, S, 3, num_heads, hd)
           .transpose(2, 0, 3, 1, 4)
           .reshape(3, B * num_heads, S, hd))
    q, k, v = qkv[0], qkv[1], qkv[2]
    attn = (q * scale) @ jnp.swapaxes(k, -2, -1)
    if use_rel_pos:
        q_bsnh = q.reshape(B, num_heads, S, hd).transpose(0, 2, 1, 3)
        rel_h, rel_w = decomposed_rel_pos_terms(
            q_bsnh, params["rel_pos_h"], params["rel_pos_w"], (H, W), (H, W))
        bias = (rel_h[..., :, None] + rel_w[..., None, :]).reshape(B * num_heads, S, S)
        attn = attn + bias
    attn = jax.nn.softmax(attn, axis=-1)
    out = attn @ v
    out = (out.reshape(B, num_heads, H, W, hd)
           .transpose(0, 2, 3, 1, 4)
           .reshape(B, H, W, dim))
    return out @ params["w_proj"] + params["b_proj"]


# ---------------------------------------------------------------------------
# Main
# ---------------------------------------------------------------------------
if __name__ == "__main__":
    B, H, W, dim = 2, 8, 8, 32
    num_heads = 4
    hd = dim // num_heads

    key = jax.random.PRNGKey(0)
    kx, kw1, kb1, kw2, kb2, kh_, kw_ = jax.random.split(key, 7)

    x = jax.random.normal(kx, (B, H, W, dim), dtype=jnp.float32)
    params = {
        "w_qkv": jax.random.normal(kw1, (dim, 3 * dim), jnp.float32) * 0.05,
        "b_qkv": jax.random.normal(kb1, (3 * dim,), jnp.float32) * 0.02,
        "w_proj": jax.random.normal(kw2, (dim, dim), jnp.float32) * 0.05,
        "b_proj": jax.random.normal(kb2, (dim,), jnp.float32) * 0.02,
        "rel_pos_h": jax.random.normal(kh_, (2 * H - 1, hd), jnp.float32) * 0.02,
        "rel_pos_w": jax.random.normal(kw_, (2 * W - 1, hd), jnp.float32) * 0.02,
    }

    # --- f32 compute path, with decomposed rel-pos bias ---
    out = jax.block_until_ready(
        attention_forward(x, params, num_heads, use_rel_pos=True,
                          compute_dtype=jnp.float32))
    ref = attention_reference(x, params, num_heads, use_rel_pos=True)
    assert out.shape == (B, H, W, dim)
    err = float(jnp.max(jnp.abs(out - ref)))
    assert jnp.allclose(out, ref, atol=2e-3, rtol=2e-3), err

    # --- f32 compute path, no rel-pos (separate static kernel variant) ---
    out_nr = jax.block_until_ready(
        attention_forward(x, params, num_heads, use_rel_pos=False,
                          compute_dtype=jnp.float32))
    ref_nr = attention_reference(x, params, num_heads, use_rel_pos=False)
    err_nr = float(jnp.max(jnp.abs(out_nr - ref_nr)))
    assert jnp.allclose(out_nr, ref_nr, atol=2e-3, rtol=2e-3), err_nr

    # --- bf16 MXU path (perf review): bf16 operands, f32 accumulate/softmax ---
    out_bf = jax.block_until_ready(
        attention_forward(x, params, num_heads, use_rel_pos=True,
                          compute_dtype=jnp.bfloat16))
    err_bf = float(jnp.max(jnp.abs(out_bf.astype(jnp.float32) - ref)))
    assert jnp.allclose(out_bf.astype(jnp.float32), ref, atol=3e-2, rtol=3e-2), err_bf

    print("KERNEL_OK")
</pallas_src>

<mosaic_0001>
module attributes {stable_mosaic.version = 11 : i64} {
  func.func @linear_kernel(%arg0: i32, %arg1: i32, %arg2: memref<64x32xf32, #tpu.memory_space<vmem>>, %arg3: memref<32x96xf32, #tpu.memory_space<vmem>>, %arg4: memref<1x96xf32, #tpu.memory_space<vmem>>, %arg5: memref<64x96xf32, #tpu.memory_space<vmem>>) attributes {dimension_semantics = [#tpu.dimension_semantics<parallel>, #tpu.dimension_semantics<parallel>], iteration_bounds = array<i64: 2, 1>, scalar_prefetch = 0 : i64, scratch_operands = 0 : i64, tpu.core_type = #tpu.core_type<tc>, window_params = [{transform_indices = @transform_0, window_bounds = array<i64: 64, 32>}, {transform_indices = @transform_1, window_bounds = array<i64: 32, 96>}, {transform_indices = @transform_2, window_bounds = array<i64: 1, 96>}, {transform_indices = @transform_3, window_bounds = array<i64: 64, 96>}]} {
    %c0 = arith.constant 0 : index
    %c0_0 = arith.constant 0 : index
    %0 = vector.load %arg2[%c0, %c0_0] : memref<64x32xf32, #tpu.memory_space<vmem>>, vector<64x32xf32>
    %c0_1 = arith.constant 0 : index
    %c0_2 = arith.constant 0 : index
    %1 = vector.load %arg3[%c0_1, %c0_2] : memref<32x96xf32, #tpu.memory_space<vmem>>, vector<32x96xf32>
    %cst = arith.constant dense<0.000000e+00> : vector<64x96xf32>
    %2 = tpu.matmul %0, %1, %cst {dimension_numbers = #tpu.dot_dimension_numbers<[1], [0], [0], [1], [0, 0, 1, 1], [], []>} : vector<64x32xf32>, vector<32x96xf32>, vector<64x96xf32> -> vector<64x96xf32>
    %c0_3 = arith.constant 0 : index
    %c0_4 = arith.constant 0 : index
    %3 = vector.load %arg4[%c0_3, %c0_4] : memref<1x96xf32, #tpu.memory_space<vmem>>, vector<1x96xf32>
    %4 = vector.broadcast %3 : vector<1x96xf32> to vector<64x96xf32>
    %5 = arith.addf %2, %4 : vector<64x96xf32>
    %c0_5 = arith.constant 0 : index
    %c0_6 = arith.constant 0 : index
    %6 = vector.load %arg5[%c0_5, %c0_6] : memref<64x96xf32, #tpu.memory_space<vmem>>, vector<64x96xf32>
    tpu.vector_store %arg5[%c0_5, %c0_6], %5 {strides = array<i32>} : memref<64x96xf32, #tpu.memory_space<vmem>>, vector<64x96xf32>,
    return
  }
  func.func @transform_0(%arg0: i32, %arg1: i32) -> (i32, i32) {
    %c0_i32 = arith.constant 0 : i32
    %c0_i32_0 = arith.constant 0 : i32
    return %arg0, %c0_i32 : i32, i32
  }
  func.func @transform_1(%arg0: i32, %arg1: i32) -> (i32, i32) {
    %c0_i32 = arith.constant 0 : i32
    %c0_i32_0 = arith.constant 0 : i32
    return %c0_i32, %arg1 : i32, i32
  }
  func.func @transform_2(%arg0: i32, %arg1: i32) -> (i32, i32) {
    %c0_i32 = arith.constant 0 : i32
    %c0_i32_0 = arith.constant 0 : i32
    return %c0_i32, %arg1 : i32, i32
  }
  func.func @transform_3(%arg0: i32, %arg1: i32) -> (i32, i32) {
    %c0_i32 = arith.constant 0 : i32
    return %arg0, %arg1 : i32, i32
  }
}

</mosaic_0001>

<llo_original>
// kernel: tpu_custom_call.1
$region0: #{tpu_custom_call.1}
  #allocation0 [shape = 'u32[]', space=smem, size = 0x4, offset = 0x4, fixed_abs, tag = 'smem constant byte address 0x4 - core index']
  #allocation1 [shape = 'u32[144,128]{1,0:T(1,128)}', space=vmem, size = 0x12000, scoped, tag = 'internal scratch']
  %s0 = inlined_call_operand.vmem [shape: f32[128,32], index: 0, kind: input, shape index: {}]
  %s1 = inlined_call_operand.vmem [shape: f32[32,96], index: 1, kind: input, shape index: {}]
  %s2 = inlined_call_operand.vmem [shape: f32[1,96], index: 2, kind: input, shape index: {}]
  %s3 = inlined_call_operand.vmem [shape: f32[128,96], index: 3, kind: output, shape index: {}]
  %s4 = sld [smem:[#allocation0]]
  $region45: #{tpu_custom_call.1} parent=0
    _
  %s6 = ssub.s32 1, %s4
  %s7 = scalar_select 0, %s6, %s4
  loop: start=0, step=1, limit=4
  $region2: #{tpu_custom_call.1} parent=0 // loop_pre_header
    _
  $region3: #{tpu_custom_call.1} parent=0 // loop_header
    %s9 = sphi 0, %s13
    %p10 = scmp.ge.s32.totalorder %s9, 4
    %s16 = sphi 0, %s28
    %s17 = sphi 0, %s24
    %s18 = sphi 0, %s16
    %s19 = sphi 0, %s17
    %s20 = sphi 0, %s18
    %s21 = sphi 0, %s19
    %s31 = sphi 0, %s33
    %s34 = sphi 0, %s31
    %s35 = sphi 0, %s34
    %s51 = sphi 0, %s35
    %s57 = sphi 0, %s59
    %s60 = sphi 0, %s57
    %s61 = sphi 0, %s60
    %s77 = sphi 0, %s61
    %s83 = sphi 0, %s85
    %s86 = sphi 0, %s83
    %s87 = sphi 0, %s86
    %s103 = sphi 0, %s87
    %s111 = sphi 0, %s113
    %s114 = sphi 0, %s111
    %s115 = sphi 0, %s114
    %s131 = sphi 0, %s115
  $region4: #{tpu_custom_call.1} parent=0 // loop_header_branch
    %12 = sbr.rel (%p10) target = $region8
  $region5: #{tpu_custom_call.1} parent=0 // loop_body
    %s14 = ssub.s32 %s9, 1
    %s15 = ssub.s32 %s9, 2
    %s22 = sadd.s32 1, %s17
    %p23 = scmp.ge.s32.totalorder %s22, 1
    %s24 = scalar_select %p23, 0, %s22
    %s25 = sadd.s32 1, %s16
    %s26 = scalar_select %p23, %s25, %s16
    %p27 = scmp.ge.s32.totalorder %s26, 2
    %s28 = scalar_select %p27, 0, %s26
    %s29 = ssub.s32 %s16, %s28
    %p30 = scmp.eq.s32.totalorder %s29, 0
    %s32 = sadd.s32 %s31, 1
    %s33 = scalar_select %p30, %s31, %s32
    %p36 = pneg %p30
    %p37 = scmp.eq.s32.totalorder %s9, 1
    %p38 = por %p36, %p37
    %p39 = scmp.ne.s32.totalorder %s31, %s34
    %p40 = scmp.eq.s32.totalorder %s9, 0
    %p41 = por %p39, %p40
    %p42 = scmp.ne.s32.totalorder %s31, %s34
    %p43 = scmp.eq.s32.totalorder %s14, 1
    %p44 = por %p42, %p43
    %p45 = scmp.ne.s32.totalorder %s34, %s35
    %p46 = scmp.eq.s32.totalorder %s14, 0
    %p47 = por %p45, %p46
    %p48 = scmp.ne.s32.totalorder %s34, %s35
    %p49 = scmp.eq.s32.totalorder %s15, 1
    %p50 = por %p48, %p49
    %p52 = scmp.ne.s32.totalorder %s35, %s51
    %p53 = scmp.eq.s32.totalorder %s15, 0
    %p54 = por %p52, %p53
    %s55 = ssub.s32 %s17, %s24
    %p56 = scmp.eq.s32.totalorder %s55, 0
    %s58 = sadd.s32 %s57, 1
    %s59 = scalar_select %p56, %s57, %s58
    %p62 = pneg %p56
    %p63 = scmp.eq.s32.totalorder %s9, 1
    %p64 = por %p62, %p63
    %p65 = scmp.ne.s32.totalorder %s57, %s60
    %p66 = scmp.eq.s32.totalorder %s9, 0
    %p67 = por %p65, %p66
    %p68 = scmp.ne.s32.totalorder %s57, %s60
    %p69 = scmp.eq.s32.totalorder %s14, 1
    %p70 = por %p68, %p69
    %p71 = scmp.ne.s32.totalorder %s60, %s61
    %p72 = scmp.eq.s32.totalorder %s14, 0
    %p73 = por %p71, %p72
    %p74 = scmp.ne.s32.totalorder %s60, %s61
    %p75 = scmp.eq.s32.totalorder %s15, 1
    %p76 = por %p74, %p75
    %p78 = scmp.ne.s32.totalorder %s61, %s77
    %p79 = scmp.eq.s32.totalorder %s15, 0
    %p80 = por %p78, %p79
    %s81 = ssub.s32 %s17, %s24
    %p82 = scmp.eq.s32.totalorder %s81, 0
    %s84 = sadd.s32 %s83, 1
    %s85 = scalar_select %p82, %s83, %s84
    %p88 = pneg %p82
    %p89 = scmp.eq.s32.totalorder %s9, 1
    %p90 = por %p88, %p89
    %p91 = scmp.ne.s32.totalorder %s83, %s86
    %p92 = scmp.eq.s32.totalorder %s9, 0
    %p93 = por %p91, %p92
    %p94 = scmp.ne.s32.totalorder %s83, %s86
    %p95 = scmp.eq.s32.totalorder %s14, 1
    %p96 = por %p94, %p95
    %p97 = scmp.ne.s32.totalorder %s86, %s87
    %p98 = scmp.eq.s32.totalorder %s14, 0
    %p99 = por %p97, %p98
    %p100 = scmp.ne.s32.totalorder %s86, %s87
    %p101 = scmp.eq.s32.totalorder %s15, 1
    %p102 = por %p100, %p101
    %p104 = scmp.ne.s32.totalorder %s87, %s103
    %p105 = scmp.eq.s32.totalorder %s15, 0
    %p106 = por %p104, %p105
    %s107 = ssub.s32 %s16, %s28
    %s108 = ssub.s32 %s17, %s24
    %s109 = sor.u32 %s107, %s108
    %p110 = scmp.eq.s32.totalorder %s109, 0
    %s112 = sadd.s32 %s111, 1
    %s113 = scalar_select %p110, %s111, %s112
    %p116 = pneg %p110
    %p117 = scmp.eq.s32.totalorder %s9, 1
    %p118 = por %p116, %p117
    %p119 = scmp.ne.s32.totalorder %s111, %s114
    %p120 = scmp.eq.s32.totalorder %s9, 0
    %p121 = por %p119, %p120
    %p122 = scmp.ne.s32.totalorder %s111, %s114
    %p123 = scmp.eq.s32.totalorder %s14, 1
    %p124 = por %p122, %p123
    %p125 = scmp.ne.s32.totalorder %s114, %s115
    %p126 = scmp.eq.s32.totalorder %s14, 0
    %p127 = por %p125, %p126
    %p128 = scmp.ne.s32.totalorder %s114, %s115
    %p129 = scmp.eq.s32.totalorder %s15, 1
    %p130 = por %p128, %p129
    %p132 = scmp.ne.s32.totalorder %s115, %s131
    %p133 = scmp.eq.s32.totalorder %s15, 0
    %p134 = por %p132, %p133
    %p135 = scmp.le.s32.totalorder 1, %s9
    %p136 = scmp.lt.s32.totalorder %s9, 3
    %p137 = pnand %p135, %p136
    %p138 = pneg %p137
    // Predicated region
    $region9: #{tpu_custom_call.1} parent=5 // pred_check
      _
    $region10: #{tpu_custom_call.1} parent=5 // pred_check_branch
      %140 = sbr.rel (%p137) target = $region12
    $region11: #{tpu_custom_call.1} parent=5 // pred_region
      %s141 = ssub.s32 %s9, 1
      // Predicated region
      $region13: #{tpu_custom_call.1} parent=11 // pred_check
        %p142 = pneg %p73
      $region14: #{tpu_custom_call.1} parent=11 // pred_check_branch
        %144 = sbr.rel (%p142) target = $region16
      $region15: #{tpu_custom_call.1} parent=11 // pred_region
        %p145 = scmp.lt.s32.totalorder %s19, 0
        %s146 = scalar_select %p145, %s19, 0
        %s147 = smul.addr %s146, 8
        %s148 = scalar_lea.vmem %s1, %s147
      $region16: #{tpu_custom_call.1} parent=11 // pred_fallthru
        _
      // Predicated region
      $region17: #{tpu_custom_call.1} parent=11 // pred_check
        %p149 = pneg %p99
      $region18: #{tpu_custom_call.1} parent=11 // pred_check_branch
        %151 = sbr.rel (%p149) target = $region20
      $region19: #{tpu_custom_call.1} parent=11 // pred_region
        %p152 = scmp.lt.s32.totalorder %s19, 0
        %s153 = scalar_select %p152, %s19, 0
        %s154 = scalar_lea.vmem %s2, %s153
      $region20: #{tpu_custom_call.1} parent=11 // pred_fallthru
        _
    $region12: #{tpu_custom_call.1} parent=5 // pred_fallthru
      _
    %p155 = scmp.lt.s32.totalorder %s9, 2
    // Predicated region
    $region21: #{tpu_custom_call.1} parent=5 // pred_check
      %p156 = pneg %p155
    $region22: #{tpu_custom_call.1} parent=5 // pred_check_branch
      %158 = sbr.rel (%p156) target = $region24
    $region23: #{tpu_custom_call.1} parent=5 // pred_region
      // Predicated region
      $region25: #{tpu_custom_call.1} parent=23 // pred_check
        %p159 = pneg %p41
      $region26: #{tpu_custom_call.1} parent=23 // pred_check_branch
        %161 = sbr.rel (%p159) target = $region28
      $region27: #{tpu_custom_call.1} parent=23 // pred_region
        %s162 = smul.u32 8, %s16
        %p163 = scmp.lt.s32.totalorder %s162, 15
        %s164 = scalar_select %p163, %s162, 15
        %s165 = smul.addr %s164, 8
        %s166 = scalar_lea.vmem %s0, %s165
        %s167 = smul.u32 8, %s16
      $region28: #{tpu_custom_call.1} parent=23 // pred_fallthru
        _
    $region24: #{tpu_custom_call.1} parent=5 // pred_fallthru
      _
    %p168 = scmp.le.s32.totalorder 1, %s9
    %p169 = scmp.lt.s32.totalorder %s9, 3
    %p170 = pnand %p168, %p169
    %p171 = pneg %p170
    // Predicated region
    $region29: #{tpu_custom_call.1} parent=5 // pred_check
      _
    $region30: #{tpu_custom_call.1} parent=5 // pred_check_branch
      %173 = sbr.rel (%p170) target = $region32
    $region31: #{tpu_custom_call.1} parent=5 // pred_region
      %s174 = ssub.s32 %s9, 1
      %s175 = smul.u32 8, %s18
      %p176 = scmp.lt.s32.totalorder %s175, 15
      %s177 = scalar_select %p176, %s175, 15
      %s178 = smul.addr %s177, 8
      %s179 = scalar_lea.vmem %s0, %s178
      %p180 = pneg %p47
      %p181 = pneg %p44
      %p182 = scmp.lt.s32.totalorder %s19, 0
      %s183 = scalar_select %p182, %s19, 0
      %s184 = smul.addr %s183, 8
      %s185 = scalar_lea.vmem %s1, %s184
      %p186 = pneg %p73
      %p187 = pneg %p70
      %p188 = scmp.lt.s32.totalorder %s19, 0
      %s189 = scalar_select %p188, %s19, 0
      %s190 = scalar_lea.vmem %s2, %s189
      %p191 = pneg %p99
      %p192 = pneg %p96
      %p193 = pneg %p127
      %p194 = pneg %p124
      %s195 = smul.u32 8, %s18
      %p196 = scmp.lt.s32.totalorder %s195, 15
      %s197 = scalar_select %p196, %s195, 15
      %p198 = scmp.lt.s32.totalorder %s19, 0
      %s199 = scalar_select %p198, %s19, 0
      %s200 = sadd.s32 %s199, %s197
      %s201 = smul.addr %s200, 8
      %s202 = scalar_lea.vmem %s3, %s201
      %s203 = smul.u32 8, %s18
      %p204 = scmp.lt.s32.totalorder %s203, 15
      %s205 = scalar_select %p204, %s203, 15
      %s206 = smul.addr %s205, 8
      %s207 = scalar_lea.vmem %s0, %s206
      %s208 = smul.u32 8, %s18
      %p209 = scmp.lt.s32.totalorder %s19, 0
      %s210 = scalar_select %p209, %s19, 0
      %s211 = smul.addr %s210, 8
      %s212 = scalar_lea.vmem %s1, %s211
      %p213 = scmp.lt.s32.totalorder %s19, 0
      %s214 = scalar_select %p213, %s19, 0
      %s215 = scalar_lea.vmem %s2, %s214
      %s216 = smul.u32 8, %s18
      %p217 = scmp.lt.s32.totalorder %s216, 15
      %s218 = scalar_select %p217, %s216, 15
      %p219 = scmp.lt.s32.totalorder %s19, 0
      %s220 = scalar_select %p219, %s19, 0
      %s221 = sadd.s32 %s220, %s218
      %s222 = smul.addr %s221, 8
      %s223 = scalar_lea.vmem %s3, %s222
      %s224 = smul.u32 8, %s18
      %v225 = vld [vmem:[%s207] sm:$0xff]
      %v226 = vld [vmem:[%s207 + $0x8] sm:$0xff]
      %v227 = vld [vmem:[%s207 + $0x10] sm:$0xff]
      %v228 = vld [vmem:[%s207 + $0x18] sm:$0xff]
      %v229 = vld [vmem:[%s207 + $0x20] sm:$0xff]
      %v230 = vld [vmem:[%s207 + $0x28] sm:$0xff]
      %v231 = vld [vmem:[%s207 + $0x30] sm:$0xff]
      %v232 = vld [vmem:[%s207 + $0x38] sm:$0xff]
      %v233 = vld [vmem:[%s212] sm:$0xff]
      %v234 = vld [vmem:[%s212 + $0x8] sm:$0xff]
      %v235 = vld [vmem:[%s212 + $0x10] sm:$0xff]
      %v236 = vld [vmem:[%s212 + $0x18] sm:$0xff]
      %v237 = vld [vmem:[%s215] sm:$0x1]
      %v239 = vlaneseq
      %v240 = vshrl.u32 %v239, 7
      %v241 = vsub.s32 0, %v240
      %v242 = vrot.slane %v237, %v241
      %vm244 = vcmask 261120
      %v246 = vsel %vm244, %v225, 0
      %v249 = vsel %vm244, %v226, 0
      %v252 = vsel %vm244, %v227, 0
      %v255 = vsel %vm244, %v228, 0
      %v258 = vsel %vm244, %v229, 0
      %v261 = vsel %vm244, %v230, 0
      %v264 = vsel %vm244, %v231, 0
      %v267 = vsel %vm244, %v232, 0
      %269 = vmatprep.subr.mxu0 0.0
      %270 = vmatpush1.msra.mxu0 0.0
      %271 = vmatprep.subr.mxu0 0.0
      %272 = vmatpush1.msra.mxu0 0.0
      %273 = vmatprep.subr.mxu0 0.0
      %274 = vmatpush1.msra.mxu0 0.0
      %275 = vmatprep.subr.mxu0 0.0
      %276 = vmatpush1.msra.mxu0 0.0
      %277 = vmatprep.subr.mxu0 0.0
      %278 = vmatpush1.msra.mxu0 0.0
      %279 = vmatprep.subr.mxu0 0.0
      %280 = vmatpush1.msra.mxu0 0.0
      %281 = vmatprep.subr.mxu0 0.0
      %282 = vmatpush1.msra.mxu0 0.0
      %283 = vmatprep.subr.mxu0 0.0
      %284 = vmatpush1.msra.mxu0 0.0
      %285 = vmatprep.subr.mxu0 0.0
      %286 = vmatpush1.msra.mxu0 0.0
      %287 = vmatprep.subr.mxu0 0.0
      %288 = vmatpush1.msra.mxu0 0.0
      %289 = vmatprep.subr.mxu0 0.0
      %290 = vmatpush1.msra.mxu0 0.0
      %291 = vmatprep.subr.mxu0 0.0
      %292 = vmatpush1.msra.mxu0 0.0
      %293 = vmatprep.subr.mxu0 0.0
      %294 = vmatpush1.msra.mxu0 %v236
      %295 = vmatprep.subr.mxu0 0.0
      %296 = vmatpush1.msra.mxu0 %v235
      %297 = vmatprep.subr.mxu0 0.0
      %298 = vmatpush1.msra.mxu0 %v234
      %299 = vmatprep.subr.mxu0 0.0
      %300 = vmatpush1.msra.mxu0 %v233
      %301 = vmatprep.subr.mxu0 0.0
      %302 = vmatpush2.msra.mxu0 0.0
      %303 = vmatprep.subr.mxu0 0.0
      %304 = vmatpush2.msra.mxu0 0.0
      %305 = vmatprep.subr.mxu0 0.0
      %306 = vmatpush2.msra.mxu0 0.0
      %307 = vmatprep.subr.mxu0 0.0
      %308 = vmatpush2.msra.mxu0 0.0
      %309 = vmatprep.subr.mxu0 0.0
      %310 = vmatpush2.msra.mxu0 0.0
      %311 = vmatprep.subr.mxu0 0.0
      %312 = vmatpush2.msra.mxu0 0.0
      %313 = vmatprep.subr.mxu0 0.0
      %314 = vmatpush2.msra.mxu0 0.0
      %315 = vmatprep.subr.mxu0 0.0
      %316 = vmatpush2.msra.mxu0 0.0
      %317 = vmatprep.subr.mxu0 0.0
      %318 = vmatpush2.msra.mxu0 0.0
      %319 = vmatprep.subr.mxu0 0.0
      %320 = vmatpush2.msra.mxu0 0.0
      %321 = vmatprep.subr.mxu0 0.0
      %322 = vmatpush2.msra.mxu0 0.0
      %323 = vmatprep.subr.mxu0 0.0
      %324 = vmatpush2.msra.mxu0 0.0
      %325 = vmatprep.subr.mxu0 0.0
      %326 = vmatpush2.msra.mxu0 0.0
      %327 = vmatprep.subr.mxu0 0.0
      %328 = vmatpush2.msra.mxu0 0.0
      %329 = vmatprep.subr.mxu0 0.0
      %330 = vmatpush2.msra.mxu0 0.0
      %331 = vmatprep.subr.mxu0 0.0
      %332 = vmatpush2.msra.mxu0 0.0
      %333 = vmatprep.mubr.f32.mxu0 0.0
      %334 = vmatmul.mubr.f32.gmra.mxu0 %v246
      %v335 = vpop.f32.mrf.mxu0
      %v336 = vadd.f32 %v242, %v335
      %v337 = vpop.f32.mrf.mxu0
      %338 = vmatprep.mubr.f32.mxu0 0.0
      %339 = vmatmul.mubr.f32.gmra.mxu0 %v249
      %v340 = vpop.f32.mrf.mxu0
      %v341 = vadd.f32 %v242, %v340
      %v342 = vpop.f32.mrf.mxu0
      %343 = vmatprep.mubr.f32.mxu0 0.0
      %344 = vmatmul.mubr.f32.gmra.mxu0 %v252
      %v345 = vpop.f32.mrf.mxu0
      %v346 = vadd.f32 %v242, %v345
      %v347 = vpop.f32.mrf.mxu0
      %348 = vmatprep.mubr.f32.mxu0 0.0
      %349 = vmatmul.mubr.f32.gmra.mxu0 %v255
      %v350 = vpop.f32.mrf.mxu0
      %v351 = vadd.f32 %v242, %v350
      %v352 = vpop.f32.mrf.mxu0
      %353 = vmatprep.mubr.f32.mxu0 0.0
      %354 = vmatmul.mubr.f32.gmra.mxu0 %v258
      %v355 = vpop.f32.mrf.mxu0
      %v356 = vadd.f32 %v242, %v355
      %v357 = vpop.f32.mrf.mxu0
      %358 = vmatprep.mubr.f32.mxu0 0.0
      %359 = vmatmul.mubr.f32.gmra.mxu0 %v261
      %v360 = vpop.f32.mrf.mxu0
      %v361 = vadd.f32 %v242, %v360
      %v362 = vpop.f32.mrf.mxu0
      %363 = vmatprep.mubr.f32.mxu0 0.0
      %364 = vmatmul.mubr.f32.gmra.mxu0 %v264
      %v365 = vpop.f32.mrf.mxu0
      %v366 = vadd.f32 %v242, %v365
      %v367 = vpop.f32.mrf.mxu0
      %368 = vmatprep.mubr.f32.mxu0 0.0
      %369 = vmatmul.mubr.f32.gmra.mxu0 %v267
      %v370 = vpop.f32.mrf.mxu0
      %v371 = vadd.f32 %v242, %v370
      %v372 = vpop.f32.mrf.mxu0
      %373 = vdwg.mxu0
      %vm374 = vcmask 785408
      %375 = vst.msk [vmem:[%s223] sm:$0xff] %vm374, %v336
      %376 = vst.msk [vmem:[%s223 + $0x8] sm:$0xff] %vm374, %v341
      %377 = vst.msk [vmem:[%s223 + $0x10] sm:$0xff] %vm374, %v346
      %378 = vst.msk [vmem:[%s223 + $0x18] sm:$0xff] %vm374, %v351
      %379 = vst.msk [vmem:[%s223 + $0x20] sm:$0xff] %vm374, %v356
      %380 = vst.msk [vmem:[%s223 + $0x28] sm:$0xff] %vm374, %v361
      %381 = vst.msk [vmem:[%s223 + $0x30] sm:$0xff] %vm374, %v366
      %382 = vst.msk [vmem:[%s223 + $0x38] sm:$0xff] %vm374, %v371
      %s383 = smul.u32 8, %s18
      %p384 = scmp.lt.s32.totalorder %s383, 15
      %s385 = scalar_select %p384, %s383, 15
      %p386 = scmp.lt.s32.totalorder %s19, 0
      %s387 = scalar_select %p386, %s19, 0
      %s388 = sadd.s32 %s387, %s385
      %s389 = smul.addr %s388, 8
      %s390 = scalar_lea.vmem %s3, %s389
      // Predicated region
      $region33: #{tpu_custom_call.1} parent=31 // pred_check
        %p391 = pneg %p124
      $region34: #{tpu_custom_call.1} parent=31 // pred_check_branch
        %393 = sbr.rel (%p391) target = $region36
      $region35: #{tpu_custom_call.1} parent=31 // pred_region
        %s394 = smul.u32 8, %s18
      $region36: #{tpu_custom_call.1} parent=31 // pred_fallthru
        _
    $region32: #{tpu_custom_call.1} parent=5 // pred_fallthru
      _
    %p395 = scmp.le.s32.totalorder 2, %s9
    // Predicated region
    $region37: #{tpu_custom_call.1} parent=5 // pred_check
      %p396 = pneg %p395
    $region38: #{tpu_custom_call.1} parent=5 // pred_check_branch
      %398 = sbr.rel (%p396) target = $region40
    $region39: #{tpu_custom_call.1} parent=5 // pred_region
      %s399 = ssub.s32 %s9, 2
      // Predicated region
      $region41: #{tpu_custom_call.1} parent=39 // pred_check
        %p400 = pneg %p130
      $region42: #{tpu_custom_call.1} parent=39 // pred_check_branch
        %402 = sbr.rel (%p400) target = $region44
      $region43: #{tpu_custom_call.1} parent=39 // pred_region
        %s403 = smul.u32 8, %s20
        %p404 = scmp.lt.s32.totalorder %s403, 15
        %s405 = scalar_select %p404, %s403, 15
        %p406 = scmp.lt.s32.totalorder %s21, 0
        %s407 = scalar_select %p406, %s21, 0
        %s408 = sadd.s32 %s407, %s405
        %s409 = smul.addr %s408, 8
        %s410 = scalar_lea.vmem %s3, %s409
      $region44: #{tpu_custom_call.1} parent=39 // pred_fallthru
        _
    $region40: #{tpu_custom_call.1} parent=5 // pred_fallthru
      _
  $region6: #{tpu_custom_call.1} parent=0 // loop_footer
    %s13 = sadd.s32 1, %s9
  $region7: #{tpu_custom_call.1} parent=0 // loop_footer_branch
    %8 = sbr.rel target = $region3
  $region8: #{tpu_custom_call.1} parent=0 // loop_exit
    _

</llo_original>
